<compile_context>
chip_gen: v7x
topology: tpu7x:2x2x1
jax: 0.10.0
libtpu: 0.0.40
codegen_flags: <defaults>
</compile_context>

<pallas_src>
import functools

import jax
import jax.numpy as jnp
from jax.experimental import pallas as pl
from jax.experimental.pallas import tpu as pltpu

LOG_SIG_MAX = 2.0
LOG_SIG_MIN = -20.0


def _round_up(x, m):
    return ((x + m - 1) // m) * m


def _gaussian_policy_kernel(state_ref, w1_ref, w2_ref, wh_ref, b_ref, out_ref,
                            *, num_actions):
    """Fused linear1->relu->linear2->relu->(mean|log_std) head + clamp."""
    hidden = w1_ref.shape[1]

    # Packed bias row: [b1 (hidden) | b2 (hidden) | bhead (head_pad)]
    b1 = b_ref[:, :hidden]
    b2 = b_ref[:, hidden:2 * hidden]
    bh = b_ref[:, 2 * hidden:]

    # bf16 on the MXU, f32 accumulation; bias add / ReLU on the VPU in f32.
    x = state_ref[...].astype(jnp.bfloat16)

    # Cast to bf16 right after the ReLU so the value carried across the layer
    # boundary (and any VMEM spill of the (TB, hidden) intermediate) is bf16.
    x1 = jnp.dot(x, w1_ref[...], preferred_element_type=jnp.float32) + b1
    x1 = jnp.maximum(x1, 0.0).astype(jnp.bfloat16)

    x2 = jnp.dot(x1, w2_ref[...], preferred_element_type=jnp.float32) + b2
    x2 = jnp.maximum(x2, 0.0).astype(jnp.bfloat16)

    # Fused mean|log_std head, padded to a lane-dense 128-wide output.
    out = jnp.dot(x2, wh_ref[...], preferred_element_type=jnp.float32) + bh

    # In-kernel clamp of the log_std lanes only (lanes [na, 2*na)); mean lanes
    # and zero-padded lanes pass through untouched.
    col = jax.lax.broadcasted_iota(jnp.int32, out.shape, 1)
    is_log_std = (col >= num_actions) & (col < 2 * num_actions)
    out = jnp.where(is_log_std, jnp.clip(out, LOG_SIG_MIN, LOG_SIG_MAX), out)

    # bf16 writeback halves the dominant HBM output stream.
    out_ref[...] = out.astype(out_ref.dtype)


def prepare_policy_params(params, compute_dtype=jnp.bfloat16):
    """One-time prep: fuse heads, pad to 128 lanes, pack biases, cast weights."""
    num_actions = params["wm"].shape[1]
    head_pad = _round_up(max(2 * num_actions, 128), 128)
    pad = head_pad - 2 * num_actions

    wh = jnp.concatenate([params["wm"], params["ws"]], axis=1)   # (hidden, 2*na)
    wh = jnp.pad(wh, ((0, 0), (0, pad)))
    bh = jnp.concatenate([params["bm"], params["bs"]], axis=1)
    bh = jnp.pad(bh, ((0, 0), (0, pad)))

    bias = jnp.concatenate([params["b1"], params["b2"], bh],
                           axis=1).astype(jnp.float32)            # (1, 2H+128)

    return {
        "w1": params["w1"].astype(compute_dtype),
        "w2": params["w2"].astype(compute_dtype),
        "wh": wh.astype(compute_dtype),
        "bias": bias,
    }


def _choose_batch_tile(batch, *, max_tile=512, min_tiles=1, align=16):
    """Balanced batch tile: bounds padding waste to < `align` rows per tile.

    `max_tile=512` — utilization saturates by TB ~ 512; larger tiles only
    inflate spill traffic.  `min_tiles=2` is recommended on v7x for B >= 512
    so the two TensorCores both get work.
    """
    n_tiles = max(min_tiles, -(-batch // max_tile))
    tb = _round_up(-(-batch // n_tiles), align)
    return tb


def gaussian_policy_forward(state, prepared, num_actions, *, min_batch_tiles=1):
    """Returns (mean, log_std), matching GaussianPolicy.forward."""
    B, num_inputs = state.shape
    hidden = prepared["w1"].shape[1]
    head_pad = prepared["wh"].shape[1]
    bias_w = prepared["bias"].shape[1]

    TB = _choose_batch_tile(B, min_tiles=min_batch_tiles)
    B_pad = _round_up(B, TB)
    if B_pad != B:
        state = jnp.pad(state, ((0, B_pad - B), (0, 0)))

    kernel = functools.partial(_gaussian_policy_kernel, num_actions=num_actions)

    out = pl.pallas_call(
        kernel,
        out_shape=jax.ShapeDtypeStruct((B_pad, head_pad), jnp.bfloat16),
        grid_spec=pltpu.PrefetchScalarGridSpec(
            num_scalar_prefetch=0,
            grid=(B_pad // TB,),
            in_specs=[
                pl.BlockSpec((TB, num_inputs), lambda i: (i, 0)),      # state tile
                pl.BlockSpec((num_inputs, hidden), lambda i: (0, 0)),  # w1 (resident)
                pl.BlockSpec((hidden, hidden), lambda i: (0, 0)),      # w2 (resident)
                pl.BlockSpec((hidden, head_pad), lambda i: (0, 0)),    # fused head
                pl.BlockSpec((1, bias_w), lambda i: (0, 0)),           # packed biases
            ],
            out_specs=pl.BlockSpec((TB, head_pad), lambda i: (i, 0)),
        ),
        # Batch axis is independent: on v7x it shards across the 2 TensorCores
        # when the grid has >= 2 steps; on v6e/v5e (single TC) it is simply a
        # serial loop and the annotation is harmless.
        compiler_params=pltpu.CompilerParams(
            dimension_semantics=("parallel",)),
    )(state, prepared["w1"], prepared["w2"], prepared["wh"], prepared["bias"])

    out = out[:B].astype(jnp.float32)
    mean = out[:, :num_actions]
    log_std = out[:, num_actions:2 * num_actions]   # already clamped in-kernel
    return mean, log_std


def _xavier_uniform(key, fan_in, fan_out, gain=1.0):
    # Matches torch.nn.init.xavier_uniform_ (gain=1).
    limit = gain * jnp.sqrt(6.0 / (fan_in + fan_out))
    return jax.random.uniform(key, (fan_in, fan_out), jnp.float32,
                              minval=-limit, maxval=limit)


def init_gaussian_policy_params(key, num_inputs, num_actions, hidden_dim=256):
    k1, k2, k3, k4 = jax.random.split(key, 4)
    return {
        "w1": _xavier_uniform(k1, num_inputs, hidden_dim),
        "b1": jnp.zeros((1, hidden_dim), jnp.float32),
        "w2": _xavier_uniform(k2, hidden_dim, hidden_dim),
        "b2": jnp.zeros((1, hidden_dim), jnp.float32),
        "wm": _xavier_uniform(k3, hidden_dim, num_actions),
        "bm": jnp.zeros((1, num_actions), jnp.float32),
        "ws": _xavier_uniform(k4, hidden_dim, num_actions),
        "bs": jnp.zeros((1, num_actions), jnp.float32),
    }


def _reference_forward_bf16(state, p):
    """Plain-JAX reference using the same bf16 recipe as the kernel."""
    w1 = p["w1"].astype(jnp.bfloat16)
    w2 = p["w2"].astype(jnp.bfloat16)
    wm = p["wm"].astype(jnp.bfloat16)
    ws = p["ws"].astype(jnp.bfloat16)
    x = state.astype(jnp.bfloat16)
    x1 = jnp.maximum(
        jnp.dot(x, w1, preferred_element_type=jnp.float32) + p["b1"],
        0.0).astype(jnp.bfloat16)
    x2 = jnp.maximum(
        jnp.dot(x1, w2, preferred_element_type=jnp.float32) + p["b2"],
        0.0).astype(jnp.bfloat16)
    mean = jnp.dot(x2, wm, preferred_element_type=jnp.float32) + p["bm"]
    log_std = jnp.clip(
        jnp.dot(x2, ws, preferred_element_type=jnp.float32) + p["bs"],
        LOG_SIG_MIN, LOG_SIG_MAX)
    # Kernel writes bf16 output; mirror that rounding here.
    return (mean.astype(jnp.bfloat16).astype(jnp.float32),
            log_std.astype(jnp.bfloat16).astype(jnp.float32))


if __name__ == "__main__":
    key = jax.random.PRNGKey(0)
    k_params, k_state = jax.random.split(key)

    batch = 8
    num_inputs = 16
    num_actions = 8
    hidden_dim = 256

    params = init_gaussian_policy_params(k_params, num_inputs, num_actions,
                                         hidden_dim=hidden_dim)
    prepared = prepare_policy_params(params)   # one-time fuse/pad/cast

    # Scale state a bit so clamp branches of log_std are exercised.
    state = 3.0 * jax.random.normal(k_state, (batch, num_inputs), jnp.float32)

    mean, log_std = gaussian_policy_forward(state, prepared, num_actions)
    jax.block_until_ready((mean, log_std))

    # Sanity check against a plain-JAX reference using the same bf16 recipe.
    mean_ref, log_std_ref = _reference_forward_bf16(state, params)
    assert mean.shape == (batch, num_actions)
    assert log_std.shape == (batch, num_actions)
    assert jnp.allclose(mean, mean_ref, atol=2e-2, rtol=2e-2)
    assert jnp.allclose(log_std, log_std_ref, atol=2e-2, rtol=2e-2)
    assert float(log_std.max()) <= LOG_SIG_MAX + 1e-6
    assert float(log_std.min()) >= LOG_SIG_MIN - 1e-6

    # TODO(synk): the stochastic `sample()` method (Normal.rsample, tanh squash,
    # log-prob correction) is host-side distribution logic, not part of the
    # forward hot path; only forward() is implemented as a kernel.
    print("KERNEL_OK")
</pallas_src>

<mosaic_0001>
module attributes {stable_mosaic.version = 11 : i64} {
  func.func @_gaussian_policy_kernel(%arg0: i32, %arg1: memref<16x16xf32, #tpu.memory_space<vmem>>, %arg2: memref<16x256xbf16, #tpu.memory_space<vmem>>, %arg3: memref<256x256xbf16, #tpu.memory_space<vmem>>, %arg4: memref<256x128xbf16, #tpu.memory_space<vmem>>, %arg5: memref<1x640xf32, #tpu.memory_space<vmem>>, %arg6: memref<16x128xbf16, #tpu.memory_space<vmem>>) attributes {dimension_semantics = [#tpu.dimension_semantics<parallel>], iteration_bounds = array<i64: 1>, scalar_prefetch = 0 : i64, scratch_operands = 0 : i64, tpu.core_type = #tpu.core_type<tc>, window_params = [{transform_indices = @transform_0, window_bounds = array<i64: 16, 16>}, {pipeline_mode = #tpu.pipeline_mode<synchronous>, transform_indices = @transform_1, window_bounds = array<i64: 16, 256>}, {pipeline_mode = #tpu.pipeline_mode<synchronous>, transform_indices = @transform_2, window_bounds = array<i64: 256, 256>}, {pipeline_mode = #tpu.pipeline_mode<synchronous>, transform_indices = @transform_3, window_bounds = array<i64: 256, 128>}, {pipeline_mode = #tpu.pipeline_mode<synchronous>, transform_indices = @transform_4, window_bounds = array<i64: 1, 640>}, {transform_indices = @transform_5, window_bounds = array<i64: 16, 128>}]} {
    %c0 = arith.constant 0 : index
    %c0_0 = arith.constant 0 : index
    %0 = vector.load %arg5[%c0, %c0_0] : memref<1x640xf32, #tpu.memory_space<vmem>>, vector<1x256xf32>
    %c0_1 = arith.constant 0 : index
    %c256 = arith.constant 256 : index
    %1 = vector.load %arg5[%c0_1, %c256] : memref<1x640xf32, #tpu.memory_space<vmem>>, vector<1x256xf32>
    %c0_2 = arith.constant 0 : index
    %c512 = arith.constant 512 : index
    %2 = vector.load %arg5[%c0_2, %c512] : memref<1x640xf32, #tpu.memory_space<vmem>>, vector<1x128xf32>
    %c0_3 = arith.constant 0 : index
    %c0_4 = arith.constant 0 : index
    %3 = vector.load %arg1[%c0_3, %c0_4] : memref<16x16xf32, #tpu.memory_space<vmem>>, vector<16x16xf32>
    %4 = arith.truncf %3 : vector<16x16xf32> to vector<16x16xbf16>
    %c0_5 = arith.constant 0 : index
    %c0_6 = arith.constant 0 : index
    %5 = vector.load %arg2[%c0_5, %c0_6] : memref<16x256xbf16, #tpu.memory_space<vmem>>, vector<16x256xbf16>
    %cst = arith.constant dense<0.000000e+00> : vector<16x256xf32>
    %6 = tpu.matmul %4, %5, %cst {dimension_numbers = #tpu.dot_dimension_numbers<[1], [0], [0], [1], [0, 0, 1, 1], [], []>} : vector<16x16xbf16>, vector<16x256xbf16>, vector<16x256xf32> -> vector<16x256xf32>
    %7 = vector.broadcast %0 : vector<1x256xf32> to vector<16x256xf32>
    %8 = arith.addf %6, %7 : vector<16x256xf32>
    %cst_7 = arith.constant 0.000000e+00 : f32
    %9 = vector.broadcast %cst_7 : f32 to vector<16x256xf32>
    %10 = arith.maximumf %8, %9 : vector<16x256xf32>
    %11 = arith.truncf %10 : vector<16x256xf32> to vector<16x256xbf16>
    %c0_8 = arith.constant 0 : index
    %c0_9 = arith.constant 0 : index
    %12 = vector.load %arg3[%c0_8, %c0_9] : memref<256x256xbf16, #tpu.memory_space<vmem>>, vector<256x256xbf16>
    %cst_10 = arith.constant dense<0.000000e+00> : vector<16x256xf32>
    %13 = tpu.matmul %11, %12, %cst_10 {dimension_numbers = #tpu.dot_dimension_numbers<[1], [0], [0], [1], [0, 0, 1, 1], [], []>} : vector<16x256xbf16>, vector<256x256xbf16>, vector<16x256xf32> -> vector<16x256xf32>
    %14 = vector.broadcast %1 : vector<1x256xf32> to vector<16x256xf32>
    %15 = arith.addf %13, %14 : vector<16x256xf32>
    %cst_11 = arith.constant 0.000000e+00 : f32
    %16 = vector.broadcast %cst_11 : f32 to vector<16x256xf32>
    %17 = arith.maximumf %15, %16 : vector<16x256xf32>
    %18 = arith.truncf %17 : vector<16x256xf32> to vector<16x256xbf16>
    %c0_12 = arith.constant 0 : index
    %c0_13 = arith.constant 0 : index
    %19 = vector.load %arg4[%c0_12, %c0_13] : memref<256x128xbf16, #tpu.memory_space<vmem>>, vector<256x128xbf16>
    %cst_14 = arith.constant dense<0.000000e+00> : vector<16x128xf32>
    %20 = tpu.matmul %18, %19, %cst_14 {dimension_numbers = #tpu.dot_dimension_numbers<[1], [0], [0], [1], [0, 0, 1, 1], [], []>} : vector<16x256xbf16>, vector<256x128xbf16>, vector<16x128xf32> -> vector<16x128xf32>
    %21 = vector.broadcast %2 : vector<1x128xf32> to vector<16x128xf32>
    %22 = arith.addf %20, %21 : vector<16x128xf32>
    %23 = tpu.iota {dimensions = array<i32: 1>} : vector<16x128xi32>
    %c8_i32 = arith.constant 8 : i32
    %24 = vector.broadcast %c8_i32 : i32 to vector<16x128xi32>
    %25 = arith.cmpi sge, %23, %24 : vector<16x128xi32>
    %c16_i32 = arith.constant 16 : i32
    %26 = vector.broadcast %c16_i32 : i32 to vector<16x128xi32>
    %27 = arith.cmpi slt, %23, %26 : vector<16x128xi32>
    %28 = arith.andi %25, %27 : vector<16x128xi1>
    %cst_15 = arith.constant -2.000000e+01 : f32
    %cst_16 = arith.constant 2.000000e+00 : f32
    %29 = vector.broadcast %cst_15 : f32 to vector<16x128xf32>
    %30 = arith.maximumf %29, %22 : vector<16x128xf32>
    %31 = vector.broadcast %cst_16 : f32 to vector<16x128xf32>
    %32 = arith.minimumf %31, %30 : vector<16x128xf32>
    %33 = arith.select %28, %32, %22 : vector<16x128xi1>, vector<16x128xf32>
    %34 = arith.truncf %33 : vector<16x128xf32> to vector<16x128xbf16>
    %c0_17 = arith.constant 0 : index
    %c0_18 = arith.constant 0 : index
    %35 = vector.load %arg6[%c0_17, %c0_18] : memref<16x128xbf16, #tpu.memory_space<vmem>>, vector<16x128xbf16>
    tpu.vector_store %arg6[%c0_17, %c0_18], %34 {strides = array<i32>} : memref<16x128xbf16, #tpu.memory_space<vmem>>, vector<16x128xbf16>,
    return
  }
  func.func @transform_0(%arg0: i32) -> (i32, i32) {
    %c0_i32 = arith.constant 0 : i32
    %c0_i32_0 = arith.constant 0 : i32
    return %arg0, %c0_i32 : i32, i32
  }
  func.func @transform_1(%arg0: i32) -> (i32, i32) {
    %c0_i32 = arith.constant 0 : i32
    %c0_i32_0 = arith.constant 0 : i32
    %c0_i32_1 = arith.constant 0 : i32
    return %c0_i32, %c0_i32_0 : i32, i32
  }
  func.func @transform_2(%arg0: i32) -> (i32, i32) {
    %c0_i32 = arith.constant 0 : i32
    %c0_i32_0 = arith.constant 0 : i32
    %c0_i32_1 = arith.constant 0 : i32
    return %c0_i32, %c0_i32_0 : i32, i32
  }
  func.func @transform_3(%arg0: i32) -> (i32, i32) {
    %c0_i32 = arith.constant 0 : i32
    %c0_i32_0 = arith.constant 0 : i32
    %c0_i32_1 = arith.constant 0 : i32
    return %c0_i32, %c0_i32_0 : i32, i32
  }
  func.func @transform_4(%arg0: i32) -> (i32, i32) {
    %c0_i32 = arith.constant 0 : i32
    %c0_i32_0 = arith.constant 0 : i32
    %c0_i32_1 = arith.constant 0 : i32
    return %c0_i32, %c0_i32_0 : i32, i32
  }
  func.func @transform_5(%arg0: i32) -> (i32, i32) {
    %c0_i32 = arith.constant 0 : i32
    %c0_i32_0 = arith.constant 0 : i32
    return %arg0, %c0_i32 : i32, i32
  }
}

</mosaic_0001>

<llo_original>
// kernel: tpu_custom_call.1
$region0: #{tpu_custom_call.1}
  #allocation0 [shape = 'u32[]', space=smem, size = 0x4, offset = 0x4, fixed_abs, tag = 'smem constant byte address 0x4 - core index']
  #allocation1 [shape = 'u32[144,128]{1,0:T(1,128)}', space=vmem, size = 0x12000, scoped, tag = 'internal scratch']
  %s0 = inlined_call_operand.hbm [shape: f32[16,16], index: 0, kind: input, shape index: {}]
  %s1 = inlined_call_operand.hbm [shape: bf16[16,256], index: 1, kind: input, shape index: {}]
  %s2 = inlined_call_operand.hbm [shape: bf16[256,256], index: 2, kind: input, shape index: {}]
  %s3 = inlined_call_operand.hbm [shape: bf16[256,128], index: 3, kind: input, shape index: {}]
  %s4 = inlined_call_operand.vmem [shape: f32[1,640], index: 4, kind: input, shape index: {}]
  %s5 = inlined_call_operand.hbm [shape: bf16[16,128], index: 5, kind: output, shape index: {}]
  %s6 = sld [smem:[#allocation0]]
  $region46: #{tpu_custom_call.1} parent=0
    _
  %s8 = ssub.s32 1, %s6
  %s9 = scalar_select 0, %s8, %s6
  $region1: #{tpu_custom_call.1} parent=0
    #allocation2 [shape = 'u8[8192]{0}', space=vmem, size = 0x2000, scoped, tag = 'input window, operand 0, single buffered']
    #allocation3 [shape = 's32[1]{0}', space=sflag, size = 0x4, scoped, tag = 'scoped memory for tpu_custom_call.1']
    #allocation4 [shape = 's32[1]{0}', space=sflag, size = 0x4, scoped, tag = 'scoped memory for tpu_custom_call.1']
    #allocation5 [shape = 'u8[8192]{0}', space=vmem, size = 0x2000, scoped, tag = 'input window, operand 1, single buffered']
    #allocation6 [shape = 's32[1]{0}', space=sflag, size = 0x4, scoped, tag = 'scoped memory for tpu_custom_call.1']
    #allocation7 [shape = 'u8[131072]{0}', space=vmem, size = 0x20000, scoped, tag = 'input window, operand 2, single buffered']
    #allocation8 [shape = 'u8[65536]{0}', space=vmem, size = 0x10000, scoped, tag = 'input window, operand 3, single buffered']
    #allocation9 [shape = 's32[1]{0}', space=sflag, size = 0x4, scoped, tag = 'scoped memory for tpu_custom_call.1']
    #allocation10 [shape = 'u8[4096]{0}', space=vmem, size = 0x1000, scoped, tag = 'output window, operand 0, single buffered']
    %10 = vsyncpa [#allocation3], 0
    %11 = vsyncpa [#allocation6], 0
    %12 = vsyncpa [#allocation9], 0
    %13 = vsyncpa [#allocation4], 0
    // Predicated region
    $region2: #{tpu_custom_call.1} parent=1 // pred_check
      _
    $region3: #{tpu_custom_call.1} parent=1 // pred_check_branch
      %15 = sbr.rel (0) target = $region5
    $region4: #{tpu_custom_call.1} parent=1 // pred_region
      %s17 = ssub.s32 256, 256
      %18 = vsyncadd [#allocation3], %s17
      %s19 = sshll.u32 [#allocation2], 4
      %s20 = int_to_ptr.vmem [resolvable:$true] %s19
      %25 = dma.hbm_to_vmem [thread:$0]  %s0, 256, %s20, [#allocation3], 128, 128, 8
    $region5: #{tpu_custom_call.1} parent=1 // pred_fallthru
      _
    // Predicated region
    $region6: #{tpu_custom_call.1} parent=1 // pred_check
      _
    $region7: #{tpu_custom_call.1} parent=1 // pred_check_branch
      %27 = sbr.rel (0) target = $region9
    $region8: #{tpu_custom_call.1} parent=1 // pred_region
      %s29 = ssub.s32 256, 256
      %30 = vsyncadd [#allocation6], %s29
      %s31 = sshll.u32 [#allocation5], 4
      %s32 = int_to_ptr.vmem [resolvable:$true] %s31
      %37 = dma.hbm_to_vmem [thread:$0]  %s1, 256, %s32, [#allocation6], 128, 128, 8
    $region9: #{tpu_custom_call.1} parent=1 // pred_fallthru
      _
    // Predicated region
    $region10: #{tpu_custom_call.1} parent=1 // pred_check
      _
    $region11: #{tpu_custom_call.1} parent=1 // pred_check_branch
      %39 = sbr.rel (0) target = $region13
    $region12: #{tpu_custom_call.1} parent=1 // pred_region
      %s41 = ssub.s32 4096, 4096
      %42 = vsyncadd [#allocation6], %s41
      %s43 = sshll.u32 [#allocation7], 4
      %s44 = int_to_ptr.vmem [resolvable:$true] %s43
      %49 = dma.hbm_to_vmem [thread:$0]  %s2, 4096, %s44, [#allocation6], 128, 128, 8
    $region13: #{tpu_custom_call.1} parent=1 // pred_fallthru
      _
    // Predicated region
    $region14: #{tpu_custom_call.1} parent=1 // pred_check
      _
    $region15: #{tpu_custom_call.1} parent=1 // pred_check_branch
      %51 = sbr.rel (0) target = $region17
    $region16: #{tpu_custom_call.1} parent=1 // pred_region
      %s53 = ssub.s32 2048, 2048
      %54 = vsyncadd [#allocation9], %s53
      %s55 = sshll.u32 [#allocation8], 4
      %s56 = int_to_ptr.vmem [resolvable:$true] %s55
      %61 = dma.hbm_to_vmem [thread:$0]  %s3, 2048, %s56, [#allocation9], 64, 64, 4
    $region17: #{tpu_custom_call.1} parent=1 // pred_fallthru
      _
    // Predicated region
    $region18: #{tpu_custom_call.1} parent=1 // pred_check
      _
    $region19: #{tpu_custom_call.1} parent=1 // pred_check_branch
      %63 = sbr.rel (0) target = $region21
    $region20: #{tpu_custom_call.1} parent=1 // pred_region
      _
    $region21: #{tpu_custom_call.1} parent=1 // pred_fallthru
      _
    // Predicated region
    $region22: #{tpu_custom_call.1} parent=1 // pred_check
      _
    $region23: #{tpu_custom_call.1} parent=1 // pred_check_branch
      %65 = sbr.rel (0) target = $region25
    $region24: #{tpu_custom_call.1} parent=1 // pred_region
      %66 = dma.done [#allocation3], 256
    $region25: #{tpu_custom_call.1} parent=1 // pred_fallthru
      _
    // Predicated region
    $region26: #{tpu_custom_call.1} parent=1 // pred_check
      _
    $region27: #{tpu_custom_call.1} parent=1 // pred_check_branch
      %68 = sbr.rel (0) target = $region29
    $region28: #{tpu_custom_call.1} parent=1 // pred_region
      %69 = dma.done [#allocation6], 256
    $region29: #{tpu_custom_call.1} parent=1 // pred_fallthru
      _
    // Predicated region
    $region30: #{tpu_custom_call.1} parent=1 // pred_check
      _
    $region31: #{tpu_custom_call.1} parent=1 // pred_check_branch
      %71 = sbr.rel (0) target = $region33
    $region32: #{tpu_custom_call.1} parent=1 // pred_region
      %72 = dma.done [#allocation6], 4096
    $region33: #{tpu_custom_call.1} parent=1 // pred_fallthru
      _
    // Predicated region
    $region34: #{tpu_custom_call.1} parent=1 // pred_check
      _
    $region35: #{tpu_custom_call.1} parent=1 // pred_check_branch
      %74 = sbr.rel (0) target = $region37
    $region36: #{tpu_custom_call.1} parent=1 // pred_region
      %75 = dma.done [#allocation9], 2048
    $region37: #{tpu_custom_call.1} parent=1 // pred_fallthru
      _
    %v77 = vld [vmem:[%s4] sm:$0x3]
    %v78 = vld [vmem:[%s4 + $0x2] sm:$0x3]
    %v79 = vld [vmem:[%s4 + $0x4] sm:$0x1]
    %v80 = vld [vmem:[#allocation2] sm:$0xff]
    %v81 = vld [vmem:[#allocation2 + $0x8] sm:$0xff]
    %v82 = vpack.c.bf16 %v81, %v80
    %v83 = vld [vmem:[#allocation5] sm:$0xff]
    %v84 = vld [vmem:[#allocation5 + $0x8] sm:$0xff]
    %v86 = vlaneseq
    %v87 = vshrl.u32 %v86, 7
    %v88 = vsub.s32 0, %v87
    %v89 = vrot.slane %v77, %v88
    %v90 = vlaneseq
    %v91 = vshrl.u32 %v90, 7
    %v92 = vsub.s32 1, %v91
    %v93 = vrot.slane %v77, %v92
    %v98 = vunpack.c.l.b16 %v83
    %v99 = vunpack.c.h.b16 %v83
    %v100 = vunpack.c.l.b16 %v84
    %v101 = vunpack.c.h.b16 %v84
    %v102 = vpack.c.b16 %v100, %v98
    %v103 = vpack.c.b16 %v101, %v99
    %vm106 = vcmask 130048
    %v108 = vsel %vm106, %v82, 0
    %110 = vmatprep.subr.bf16.mxu0 %v103
    %111 = vmatpush1.bf16.msra.mxu0 %v102
    %112 = vmatprep.subr.bf16.mxu0 0
    %113 = vmatpush1.bf16.msra.mxu0 0
    %114 = vmatprep.subr.bf16.mxu0 0
    %115 = vmatpush1.bf16.msra.mxu0 0
    %116 = vmatprep.subr.bf16.mxu0 0
    %117 = vmatpush1.bf16.msra.mxu0 0
    %118 = vmatprep.subr.bf16.mxu0 0
    %119 = vmatpush1.bf16.msra.mxu0 0
    %120 = vmatprep.subr.bf16.mxu0 0
    %121 = vmatpush1.bf16.msra.mxu0 0
    %122 = vmatprep.subr.bf16.mxu0 0
    %123 = vmatpush1.bf16.msra.mxu0 0
    %124 = vmatprep.subr.bf16.mxu0 0
    %125 = vmatpush1.bf16.msra.mxu0 0
    %126 = vmatprep.subr.bf16.mxu0 0
    %127 = vmatpush1.bf16.msra.mxu0 0
    %128 = vmatprep.subr.bf16.mxu0 0
    %129 = vmatpush1.bf16.msra.mxu0 0
    %130 = vmatprep.subr.bf16.mxu0 0
    %131 = vmatpush1.bf16.msra.mxu0 0
    %132 = vmatprep.subr.bf16.mxu0 0
    %133 = vmatpush1.bf16.msra.mxu0 0
    %134 = vmatprep.subr.bf16.mxu0 0
    %135 = vmatpush1.bf16.msra.mxu0 0
    %136 = vmatprep.subr.bf16.mxu0 0
    %137 = vmatpush1.bf16.msra.mxu0 0
    %138 = vmatprep.subr.bf16.mxu0 0
    %139 = vmatpush1.bf16.msra.mxu0 0
    %140 = vmatprep.subr.bf16.mxu0 0
    %141 = vmatpush1.bf16.msra.mxu0 0
    %142 = vmatprep.mubr.bf16.mxu0 0
    %143 = vmatmul.mubr.bf16.gmra.mrb[0].mxu0 %v108
    %v144 = vpop.f32.mrb[0].mxu0
    %v145 = vadd.f32 %v89, %v144
    %v146 = vpop.f32.mrb[0].mxu0
    %v147 = vadd.f32 %v93, %v146
    %v148 = vpop.f32.mrb[0].mxu0
    %v149 = vadd.f32 %v89, %v148
    %v150 = vpop.f32.mrb[0].mxu0
    %v151 = vadd.f32 %v93, %v150
    %152 = vdwg.mxu0
    %v153 = vmax.f32 %v145, 0.0
    %v154 = vmax.f32 %v147, 0.0
    %v155 = vmax.f32 %v149, 0.0
    %v156 = vmax.f32 %v151, 0.0
    %v157 = vpack.c.bf16 %v155, %v153
    %v158 = vpack.c.bf16 %v156, %v154
    %v159 = vld [vmem:[#allocation7] sm:$0xff]
    %v160 = vld [vmem:[#allocation7 + $0x8] sm:$0xff]
    %v161 = vld [vmem:[#allocation7 + $0x10] sm:$0xff]
    %v162 = vld [vmem:[#allocation7 + $0x18] sm:$0xff]
    %v163 = vld [vmem:[#allocation7 + $0x20] sm:$0xff]
    %v164 = vld [vmem:[#allocation7 + $0x28] sm:$0xff]
    %v165 = vld [vmem:[#allocation7 + $0x30] sm:$0xff]
    %v166 = vld [vmem:[#allocation7 + $0x38] sm:$0xff]
    %v167 = vld [vmem:[#allocation7 + $0x40] sm:$0xff]
    %v168 = vld [vmem:[#allocation7 + $0x48] sm:$0xff]
    %v169 = vld [vmem:[#allocation7 + $0x50] sm:$0xff]
    %v170 = vld [vmem:[#allocation7 + $0x58] sm:$0xff]
    %v171 = vld [vmem:[#allocation7 + $0x60] sm:$0xff]
    %v172 = vld [vmem:[#allocation7 + $0x68] sm:$0xff]
    %v173 = vld [vmem:[#allocation7 + $0x70] sm:$0xff]
    %v174 = vld [vmem:[#allocation7 + $0x78] sm:$0xff]
    %v175 = vld [vmem:[#allocation7 + $0x80] sm:$0xff]
    %v176 = vld [vmem:[#allocation7 + $0x88] sm:$0xff]
    %v177 = vld [vmem:[#allocation7 + $0x90] sm:$0xff]
    %v178 = vld [vmem:[#allocation7 + $0x98] sm:$0xff]
    %v179 = vld [vmem:[#allocation7 + $0xa0] sm:$0xff]
    %v180 = vld [vmem:[#allocation7 + $0xa8] sm:$0xff]
    %v181 = vld [vmem:[#allocation7 + $0xb0] sm:$0xff]
    %v182 = vld [vmem:[#allocation7 + $0xb8] sm:$0xff]
    %v183 = vld [vmem:[#allocation7 + $0xc0] sm:$0xff]
    %v184 = vld [vmem:[#allocation7 + $0xc8] sm:$0xff]
    %v185 = vld [vmem:[#allocation7 + $0xd0] sm:$0xff]
    %v186 = vld [vmem:[#allocation7 + $0xd8] sm:$0xff]
    %v187 = vld [vmem:[#allocation7 + $0xe0] sm:$0xff]
    %v188 = vld [vmem:[#allocation7 + $0xe8] sm:$0xff]
    %v189 = vld [vmem:[#allocation7 + $0xf0] sm:$0xff]
    %v190 = vld [vmem:[#allocation7 + $0xf8] sm:$0xff]
    %v192 = vlaneseq
    %v193 = vshrl.u32 %v192, 7
    %v194 = vsub.s32 0, %v193
    %v195 = vrot.slane %v78, %v194
    %v196 = vlaneseq
    %v197 = vshrl.u32 %v196, 7
    %v198 = vsub.s32 1, %v197
    %v199 = vrot.slane %v78, %v198
    %v234 = vunpack.c.l.b16 %v159
    %v235 = vunpack.c.h.b16 %v159
    %v236 = vunpack.c.l.b16 %v160
    %v237 = vunpack.c.h.b16 %v160
    %v238 = vunpack.c.l.b16 %v161
    %v239 = vunpack.c.h.b16 %v161
    %v240 = vunpack.c.l.b16 %v162
    %v241 = vunpack.c.h.b16 %v162
    %v242 = vunpack.c.l.b16 %v163
    %v243 = vunpack.c.h.b16 %v163
    %v244 = vunpack.c.l.b16 %v164
    %v245 = vunpack.c.h.b16 %v164
    %v246 = vunpack.c.l.b16 %v165
    %v247 = vunpack.c.h.b16 %v165
    %v248 = vunpack.c.l.b16 %v166
    %v249 = vunpack.c.h.b16 %v166
    %v250 = vunpack.c.l.b16 %v167
    %v251 = vunpack.c.h.b16 %v167
    %v252 = vunpack.c.l.b16 %v168
    %v253 = vunpack.c.h.b16 %v168
    %v254 = vunpack.c.l.b16 %v169
    %v255 = vunpack.c.h.b16 %v169
    %v256 = vunpack.c.l.b16 %v170
    %v257 = vunpack.c.h.b16 %v170
    %v258 = vunpack.c.l.b16 %v171
    %v259 = vunpack.c.h.b16 %v171
    %v260 = vunpack.c.l.b16 %v172
    %v261 = vunpack.c.h.b16 %v172
    %v262 = vunpack.c.l.b16 %v173
    %v263 = vunpack.c.h.b16 %v173
    %v264 = vunpack.c.l.b16 %v174
    %v265 = vunpack.c.h.b16 %v174
    %v266 = vunpack.c.l.b16 %v175
    %v267 = vunpack.c.h.b16 %v175
    %v268 = vunpack.c.l.b16 %v176
    %v269 = vunpack.c.h.b16 %v176
    %v270 = vunpack.c.l.b16 %v177
    %v271 = vunpack.c.h.b16 %v177
    %v272 = vunpack.c.l.b16 %v178
    %v273 = vunpack.c.h.b16 %v178
    %v274 = vunpack.c.l.b16 %v179
    %v275 = vunpack.c.h.b16 %v179
    %v276 = vunpack.c.l.b16 %v180
    %v277 = vunpack.c.h.b16 %v180
    %v278 = vunpack.c.l.b16 %v181
    %v279 = vunpack.c.h.b16 %v181
    %v280 = vunpack.c.l.b16 %v182
    %v281 = vunpack.c.h.b16 %v182
    %v282 = vunpack.c.l.b16 %v183
    %v283 = vunpack.c.h.b16 %v183
    %v284 = vunpack.c.l.b16 %v184
    %v285 = vunpack.c.h.b16 %v184
    %v286 = vunpack.c.l.b16 %v185
    %v287 = vunpack.c.h.b16 %v185
    %v288 = vunpack.c.l.b16 %v186
    %v289 = vunpack.c.h.b16 %v186
    %v290 = vunpack.c.l.b16 %v187
    %v291 = vunpack.c.h.b16 %v187
    %v292 = vunpack.c.l.b16 %v188
    %v293 = vunpack.c.h.b16 %v188
    %v294 = vunpack.c.l.b16 %v189
    %v295 = vunpack.c.h.b16 %v189
    %v296 = vunpack.c.l.b16 %v190
    %v297 = vunpack.c.h.b16 %v190
    %v298 = vpack.c.b16 %v236, %v234
    %v299 = vpack.c.b16 %v237, %v235
    %v300 = vpack.c.b16 %v240, %v238
    %v301 = vpack.c.b16 %v241, %v239
    %v302 = vpack.c.b16 %v244, %v242
    %v303 = vpack.c.b16 %v245, %v243
    %v304 = vpack.c.b16 %v248, %v246
    %v305 = vpack.c.b16 %v249, %v247
    %v306 = vpack.c.b16 %v252, %v250
    %v307 = vpack.c.b16 %v253, %v251
    %v308 = vpack.c.b16 %v256, %v254
    %v309 = vpack.c.b16 %v257, %v255
    %v310 = vpack.c.b16 %v260, %v258
    %v311 = vpack.c.b16 %v261, %v259
    %v312 = vpack.c.b16 %v264, %v262
    %v313 = vpack.c.b16 %v265, %v263
    %v314 = vpack.c.b16 %v268, %v266
    %v315 = vpack.c.b16 %v269, %v267
    %v316 = vpack.c.b16 %v272, %v270
    %v317 = vpack.c.b16 %v273, %v271
    %v318 = vpack.c.b16 %v276, %v274
    %v319 = vpack.c.b16 %v277, %v275
    %v320 = vpack.c.b16 %v280, %v278
    %v321 = vpack.c.b16 %v281, %v279
    %v322 = vpack.c.b16 %v284, %v282
    %v323 = vpack.c.b16 %v285, %v283
    %v324 = vpack.c.b16 %v288, %v286
    %v325 = vpack.c.b16 %v289, %v287
    %v326 = vpack.c.b16 %v292, %v290
    %v327 = vpack.c.b16 %v293, %v291
    %v328 = vpack.c.b16 %v296, %v294
    %v329 = vpack.c.b16 %v297, %v295
    %362 = vmatprep.subr.bf16.mxu0 %v299
    %363 = vmatpush1.bf16.msra.mxu0 %v298
    %364 = vmatprep.subr.bf16.mxu0 %v301
    %365 = vmatpush1.bf16.msra.mxu0 %v300
    %366 = vmatprep.subr.bf16.mxu0 %v303
    %367 = vmatpush1.bf16.msra.mxu0 %v302
    %368 = vmatprep.subr.bf16.mxu0 %v305
    %369 = vmatpush1.bf16.msra.mxu0 %v304
    %370 = vmatprep.subr.bf16.mxu0 %v307
    %371 = vmatpush1.bf16.msra.mxu0 %v306
    %372 = vmatprep.subr.bf16.mxu0 %v309
    %373 = vmatpush1.bf16.msra.mxu0 %v308
    %374 = vmatprep.subr.bf16.mxu0 %v311
    %375 = vmatpush1.bf16.msra.mxu0 %v310
    %376 = vmatprep.subr.bf16.mxu0 %v313
    %377 = vmatpush1.bf16.msra.mxu0 %v312
    %378 = vmatprep.subr.bf16.mxu0 %v315
    %379 = vmatpush1.bf16.msra.mxu0 %v314
    %380 = vmatprep.subr.bf16.mxu0 %v317
    %381 = vmatpush1.bf16.msra.mxu0 %v316
    %382 = vmatprep.subr.bf16.mxu0 %v319
    %383 = vmatpush1.bf16.msra.mxu0 %v318
    %384 = vmatprep.subr.bf16.mxu0 %v321
    %385 = vmatpush1.bf16.msra.mxu0 %v320
    %386 = vmatprep.subr.bf16.mxu0 %v323
    %387 = vmatpush1.bf16.msra.mxu0 %v322
    %388 = vmatprep.subr.bf16.mxu0 %v325
    %389 = vmatpush1.bf16.msra.mxu0 %v324
    %390 = vmatprep.subr.bf16.mxu0 %v327
    %391 = vmatpush1.bf16.msra.mxu0 %v326
    %392 = vmatprep.subr.bf16.mxu0 %v329
    %393 = vmatpush1.bf16.msra.mxu0 %v328
    %394 = vmatprep.mubr.bf16.mxu0 %v158
    %395 = vmatmul.mubr.bf16.gmra.mrb[0].mxu0 %v157
    %v396 = vpop.f32.mrb[0].mxu0
    %v397 = vadd.f32 %v195, %v396
    %v398 = vpop.f32.mrb[0].mxu0
    %v399 = vadd.f32 %v199, %v398
    %v400 = vpop.f32.mrb[0].mxu0
    %v401 = vadd.f32 %v195, %v400
    %v402 = vpop.f32.mrb[0].mxu0
    %v403 = vadd.f32 %v199, %v402
    %404 = vdwg.mxu0
    %v405 = vmax.f32 %v397, 0.0
    %v406 = vmax.f32 %v399, 0.0
    %v407 = vmax.f32 %v401, 0.0
    %v408 = vmax.f32 %v403, 0.0
    %v409 = vpack.c.bf16 %v407, %v405
    %v410 = vpack.c.bf16 %v408, %v406
    %v411 = vld [vmem:[#allocation8] sm:$0xf]
    %v412 = vld [vmem:[#allocation8 + $0x4] sm:$0xf]
    %v413 = vld [vmem:[#allocation8 + $0x8] sm:$0xf]
    %v414 = vld [vmem:[#allocation8 + $0xc] sm:$0xf]
    %v415 = vld [vmem:[#allocation8 + $0x10] sm:$0xf]
    %v416 = vld [vmem:[#allocation8 + $0x14] sm:$0xf]
    %v417 = vld [vmem:[#allocation8 + $0x18] sm:$0xf]
    %v418 = vld [vmem:[#allocation8 + $0x1c] sm:$0xf]
    %v419 = vld [vmem:[#allocation8 + $0x20] sm:$0xf]
    %v420 = vld [vmem:[#allocation8 + $0x24] sm:$0xf]
    %v421 = vld [vmem:[#allocation8 + $0x28] sm:$0xf]
    %v422 = vld [vmem:[#allocation8 + $0x2c] sm:$0xf]
    %v423 = vld [vmem:[#allocation8 + $0x30] sm:$0xf]
    %v424 = vld [vmem:[#allocation8 + $0x34] sm:$0xf]
    %v425 = vld [vmem:[#allocation8 + $0x38] sm:$0xf]
    %v426 = vld [vmem:[#allocation8 + $0x3c] sm:$0xf]
    %v427 = vld [vmem:[#allocation8 + $0x40] sm:$0xf]
    %v428 = vld [vmem:[#allocation8 + $0x44] sm:$0xf]
    %v429 = vld [vmem:[#allocation8 + $0x48] sm:$0xf]
    %v430 = vld [vmem:[#allocation8 + $0x4c] sm:$0xf]
    %v431 = vld [vmem:[#allocation8 + $0x50] sm:$0xf]
    %v432 = vld [vmem:[#allocation8 + $0x54] sm:$0xf]
    %v433 = vld [vmem:[#allocation8 + $0x58] sm:$0xf]
    %v434 = vld [vmem:[#allocation8 + $0x5c] sm:$0xf]
    %v435 = vld [vmem:[#allocation8 + $0x60] sm:$0xf]
    %v436 = vld [vmem:[#allocation8 + $0x64] sm:$0xf]
    %v437 = vld [vmem:[#allocation8 + $0x68] sm:$0xf]
    %v438 = vld [vmem:[#allocation8 + $0x6c] sm:$0xf]
    %v439 = vld [vmem:[#allocation8 + $0x70] sm:$0xf]
    %v440 = vld [vmem:[#allocation8 + $0x74] sm:$0xf]
    %v441 = vld [vmem:[#allocation8 + $0x78] sm:$0xf]
    %v442 = vld [vmem:[#allocation8 + $0x7c] sm:$0xf]
    %v444 = vlaneseq
    %v445 = vshrl.u32 %v444, 7
    %v446 = vsub.s32 0, %v445
    %v447 = vrot.slane %v79, %v446
    %v481 = vunpack.c.l.b16 %v411
    %v482 = vunpack.c.l.b16 %v412
    %v483 = vunpack.c.l.b16 %v413
    %v484 = vunpack.c.l.b16 %v414
    %v485 = vunpack.c.l.b16 %v415
    %v486 = vunpack.c.l.b16 %v416
    %v487 = vunpack.c.l.b16 %v417
    %v488 = vunpack.c.l.b16 %v418
    %v489 = vunpack.c.l.b16 %v419
    %v490 = vunpack.c.l.b16 %v420
    %v491 = vunpack.c.l.b16 %v421
    %v492 = vunpack.c.l.b16 %v422
    %v493 = vunpack.c.l.b16 %v423
    %v494 = vunpack.c.l.b16 %v424
    %v495 = vunpack.c.l.b16 %v425
    %v496 = vunpack.c.l.b16 %v426
    %v497 = vunpack.c.l.b16 %v427
    %v498 = vunpack.c.l.b16 %v428
    %v499 = vunpack.c.l.b16 %v429
    %v500 = vunpack.c.l.b16 %v430
    %v501 = vunpack.c.l.b16 %v431
    %v502 = vunpack.c.l.b16 %v432
    %v503 = vunpack.c.l.b16 %v433
    %v504 = vunpack.c.l.b16 %v434
    %v505 = vunpack.c.l.b16 %v435
    %v506 = vunpack.c.l.b16 %v436
    %v507 = vunpack.c.l.b16 %v437
    %v508 = vunpack.c.l.b16 %v438
    %v509 = vunpack.c.l.b16 %v439
    %v510 = vunpack.c.l.b16 %v440
    %v511 = vunpack.c.l.b16 %v441
    %v512 = vunpack.c.l.b16 %v442
    %v513 = vpack.c.b16 %v482, %v481
    %v514 = vpack.c.b16 %v484, %v483
    %v515 = vpack.c.b16 %v486, %v485
    %v516 = vpack.c.b16 %v488, %v487
    %v517 = vpack.c.b16 %v490, %v489
    %v518 = vpack.c.b16 %v492, %v491
    %v519 = vpack.c.b16 %v494, %v493
    %v520 = vpack.c.b16 %v496, %v495
    %v521 = vpack.c.b16 %v498, %v497
    %v522 = vpack.c.b16 %v500, %v499
    %v523 = vpack.c.b16 %v502, %v501
    %v524 = vpack.c.b16 %v504, %v503
    %v525 = vpack.c.b16 %v506, %v505
    %v526 = vpack.c.b16 %v508, %v507
    %v527 = vpack.c.b16 %v510, %v509
    %v528 = vpack.c.b16 %v512, %v511
    %545 = vmatprep.subr.bf16.mxu0 0
    %546 = vmatpush1.bf16.msra.mxu0 %v513
    %547 = vmatprep.subr.bf16.mxu0 0
    %548 = vmatpush1.bf16.msra.mxu0 %v514
    %549 = vmatprep.subr.bf16.mxu0 0
    %550 = vmatpush1.bf16.msra.mxu0 %v515
    %551 = vmatprep.subr.bf16.mxu0 0
    %552 = vmatpush1.bf16.msra.mxu0 %v516
    %553 = vmatprep.subr.bf16.mxu0 0
    %554 = vmatpush1.bf16.msra.mxu0 %v517
    %555 = vmatprep.subr.bf16.mxu0 0
    %556 = vmatpush1.bf16.msra.mxu0 %v518
    %557 = vmatprep.subr.bf16.mxu0 0
    %558 = vmatpush1.bf16.msra.mxu0 %v519
    %559 = vmatprep.subr.bf16.mxu0 0
    %560 = vmatpush1.bf16.msra.mxu0 %v520
    %561 = vmatprep.subr.bf16.mxu0 0
    %562 = vmatpush1.bf16.msra.mxu0 %v521
    %563 = vmatprep.subr.bf16.mxu0 0
    %564 = vmatpush1.bf16.msra.mxu0 %v522
    %565 = vmatprep.subr.bf16.mxu0 0
    %566 = vmatpush1.bf16.msra.mxu0 %v523
    %567 = vmatprep.subr.bf16.mxu0 0
    %568 = vmatpush1.bf16.msra.mxu0 %v524
    %569 = vmatprep.subr.bf16.mxu0 0
    %570 = vmatpush1.bf16.msra.mxu0 %v525
    %571 = vmatprep.subr.bf16.mxu0 0
    %572 = vmatpush1.bf16.msra.mxu0 %v526
    %573 = vmatprep.subr.bf16.mxu0 0
    %574 = vmatpush1.bf16.msra.mxu0 %v527
    %575 = vmatprep.subr.bf16.mxu0 0
    %576 = vmatpush1.bf16.msra.mxu0 %v528
    %577 = vmatprep.mubr.bf16.mxu0 %v410
    %578 = vmatmul.mubr.bf16.gmra.mrb[0].mxu0 %v409
    %v579 = vpop.f32.mrb[0].mxu0
    %v580 = vadd.f32 %v447, %v579
    %v581 = vpop.f32.mrb[0].mxu0
    %v582 = vpop.f32.mrb[0].mxu0
    %v583 = vadd.f32 %v447, %v582
    %v584 = vpop.f32.mrb[0].mxu0
    %585 = vdwg.mxu0
    %v586 = vlaneseq
    %v587 = vand.u32 %v586, 127
    %vm588 = vcmp.ge.s32.totalorder %v587, 8
    %vm589 = vcmp.lt.s32.totalorder %v587, 16
    %vm590 = vmand %vm588, %vm589
    %v591 = vmax.f32 %v580, -20.0
    %v592 = vmax.f32 %v583, -20.0
    %v593 = vmin.f32 %v591, 2.0
    %v594 = vmin.f32 %v592, 2.0
    %v595 = vsel %vm590, %v593, %v580
    %v596 = vsel %vm590, %v594, %v583
    %v597 = vpack.c.bf16 %v596, %v595
    %v599 = vunpack.c.l.b16 %v597
    %v600 = vunpack.c.h.b16 %v597
    %v601 = vpack.c.b16 %v599, %v599
    %v602 = vpack.c.b16 %v600, %v600
    %605 = vst [vmem:[#allocation10] sm:$0xf] %v601
    %606 = vst [vmem:[#allocation10 + $0x4] sm:$0xf] %v602
    // Predicated region
    $region38: #{tpu_custom_call.1} parent=1 // pred_check
      _
    $region39: #{tpu_custom_call.1} parent=1 // pred_check_branch
      %608 = sbr.rel (0) target = $region41
    $region40: #{tpu_custom_call.1} parent=1 // pred_region
      %s610 = ssub.s32 128, 128
      %611 = vsyncadd [#allocation4], %s610
      %s612 = sshll.u32 [#allocation10], 4
      %s613 = int_to_ptr.vmem [resolvable:$true] %s612
      %618 = dma.vmem_to_hbm [thread:$0]  %s613, 128, %s5, [#allocation4], 64, 64, 4
    $region41: #{tpu_custom_call.1} parent=1 // pred_fallthru
      _
    // Predicated region
    $region42: #{tpu_custom_call.1} parent=1 // pred_check
      _
    $region43: #{tpu_custom_call.1} parent=1 // pred_check_branch
      %620 = sbr.rel (0) target = $region45
    $region44: #{tpu_custom_call.1} parent=1 // pred_region
      %621 = dma.done [#allocation4], 128
    $region45: #{tpu_custom_call.1} parent=1 // pred_fallthru
      _
    %622 = vsyncpa [#allocation3], 1
    %623 = vsyncpa [#allocation6], 1
    %624 = vsyncpa [#allocation9], 1
    %625 = vsyncpa [#allocation4], 1

</llo_original>
